<compile_context>
chip_gen: v6e
topology: v6e:2x2x1
jax: 0.10.0
libtpu: 0.0.40
codegen_flags: <defaults>
</compile_context>

<pallas_src>
import jax
import jax.numpy as jnp
from jax.experimental import pallas as pl
from jax.experimental.pallas import tpu as pltpu

_INV_LN2 = 1.4426950408889634  # 1 / ln(2)


# ----------------------------------------------------------------------------
# Kernels
# ----------------------------------------------------------------------------
def _mi_single_block_kernel(ct_ref, out_ref):
    """Whole table resident in VMEM (small/medium tables).

    Uses MI = sum T*log2 T - sum mx*log2 mx - sum my*log2 my (entropy form).
    """
    ct = ct_ref[...].astype(jnp.float32)

    safe = jnp.where(ct > 0.0, ct, 1.0)
    plogp = jnp.sum(ct * (jnp.log(safe) * _INV_LN2))   # exact 0 where ct == 0

    mx = jnp.sum(ct, axis=1, keepdims=True)            # (R, 1)
    my = jnp.sum(ct, axis=0, keepdims=True)            # (1, C)
    hx = jnp.sum(mx * (jnp.log(jnp.where(mx > 0.0, mx, 1.0)) * _INV_LN2))
    hy = jnp.sum(my * (jnp.log(jnp.where(my > 0.0, my, 1.0)) * _INV_LN2))

    out_ref[0, 0] = plogp - hx - hy


def _make_tiled_kernel(R, C, tm, tn):
    """Single-pass tiled kernel (table read exactly once from HBM).

    Outputs per grid step:
      rowsum_ref   (tm, 1)   : row sums, accumulated across the inner j axis
      rowplogp_ref (tm, 1)   : per-row  sum T*log2(T), accumulated across j
      colsum_ref   (1,1,tn)  : column-sum partial for this (row-block, j) tile
    Row-block outputs are resident across the inner ("arbitrary") j axis and
    their block index depends only on i, so axis 0 can be "parallel".
    """
    mask_rows = (R % tm) != 0
    mask_cols = (C % tn) != 0

    def kernel(ct_ref, rowsum_ref, rowplogp_ref, colsum_ref):
        i = pl.program_id(0)
        j = pl.program_id(1)

        ct = ct_ref[...].astype(jnp.float32)            # (tm, tn), per-tile cast

        # Mask the garbage in ragged edge tiles (only traced in when needed).
        if mask_rows:
            rid = i * tm + jax.lax.broadcasted_iota(jnp.int32, (tm, tn), 0)
            ct = jnp.where(rid < R, ct, 0.0)
        if mask_cols:
            cid = j * tn + jax.lax.broadcasted_iota(jnp.int32, (tm, tn), 1)
            ct = jnp.where(cid < C, ct, 0.0)

        safe = jnp.where(ct > 0.0, ct, 1.0)
        plogp = ct * (jnp.log(safe) * _INV_LN2)         # one EUP log / element

        @pl.when(j == 0)
        def _():
            rowsum_ref[...] = jnp.zeros_like(rowsum_ref)
            rowplogp_ref[...] = jnp.zeros_like(rowplogp_ref)

        rowsum_ref[...] += jnp.sum(ct, axis=1, keepdims=True)
        rowplogp_ref[...] += jnp.sum(plogp, axis=1, keepdims=True)
        # Each (i, j) column-partial block is written exactly once (no revisit),
        # which keeps axis 0 megacore-safe.
        colsum_ref[...] = jnp.sum(ct, axis=0, keepdims=True).reshape(1, 1, tn)

    return kernel


# ----------------------------------------------------------------------------
# Wrapper
# ----------------------------------------------------------------------------
def mutual_information(contingency_table: jax.Array,
                       *,
                       single_block_max_elems: int = 2 * 1024 * 1024,
                       tile_rows: int = 512,
                       tile_cols: int = 1024,
                       vmem_limit_bytes: int = 64 * 1024 * 1024) -> jax.Array:
    """Mutual information of a 2-D contingency table (scalar float32).

    NOTE: like any contingency table, entries are assumed non-negative (the
    entropy decomposition used here is exact under that assumption).
    """
    ct = contingency_table
    if ct.ndim != 2:
        raise ValueError(f"expected a 2-D contingency table, got shape {ct.shape}")
    R, C = ct.shape

    # ---------------- small/medium table: one VMEM-resident block ------------
    if R * C <= single_block_max_elems:
        out = pl.pallas_call(
            _mi_single_block_kernel,
            out_shape=jax.ShapeDtypeStruct((1, 1), jnp.float32),
            in_specs=[pl.BlockSpec(memory_space=pltpu.MemorySpace.VMEM)],
            out_specs=pl.BlockSpec(memory_space=pltpu.MemorySpace.SMEM),
            compiler_params=pltpu.CompilerParams(
                vmem_limit_bytes=vmem_limit_bytes),
        )(ct)
        return out[0, 0]

    # ---------------- tiled, single-pass, pipelined path ---------------------
    # Block dims must be multiples of (8, 128) or equal the full array dims.
    tm = R if R <= tile_rows else max(8, (tile_rows // 8) * 8)
    tn = C if C <= tile_cols else max(128, (tile_cols // 128) * 128)
    ni = -(-R // tm)
    nj = -(-C // tn)

    kernel = _make_tiled_kernel(R, C, tm, tn)

    rowsum, rowplogp, colsum_part = pl.pallas_call(
        kernel,
        out_shape=(
            jax.ShapeDtypeStruct((R, 1), jnp.float32),      # row sums
            jax.ShapeDtypeStruct((R, 1), jnp.float32),      # per-row sum T*log2 T
            jax.ShapeDtypeStruct((ni, 1, C), jnp.float32),  # col-sum partials / row block
        ),
        grid_spec=pltpu.PrefetchScalarGridSpec(
            num_scalar_prefetch=0,
            grid=(ni, nj),
            in_specs=[pl.BlockSpec((tm, tn), lambda i, j: (i, j))],
            out_specs=(
                pl.BlockSpec((tm, 1), lambda i, j: (i, 0)),
                pl.BlockSpec((tm, 1), lambda i, j: (i, 0)),
                pl.BlockSpec((1, 1, tn), lambda i, j: (i, 0, j)),
            ),
        ),
        compiler_params=pltpu.CompilerParams(
            dimension_semantics=("parallel", "arbitrary"),
            vmem_limit_bytes=vmem_limit_bytes),
    )(ct)

    # Tiny wrapper-side finish (vectors only; negligible vs. the table pass).
    row_sums = rowsum[:, 0]                                  # (R,)
    col_sums = jnp.sum(colsum_part, axis=0)[0]               # (C,)
    plogp = jnp.sum(rowplogp)
    hx = jnp.sum(row_sums * jnp.log2(jnp.where(row_sums > 0.0, row_sums, 1.0)))
    hy = jnp.sum(col_sums * jnp.log2(jnp.where(col_sums > 0.0, col_sums, 1.0)))
    return plogp - hx - hy


# ----------------------------------------------------------------------------
# Pure-JAX reference (mirrors the PyTorch double loop, ratio form)
# ----------------------------------------------------------------------------
def _mi_reference(ct: jax.Array) -> jax.Array:
    ct = ct.astype(jnp.float32)
    mx = ct.sum(axis=1, keepdims=True)
    my = ct.sum(axis=0, keepdims=True)
    pos = ct > 0.0
    safe_ct = jnp.where(pos, ct, 1.0)
    safe_den = jnp.where(pos, mx * my, 1.0)
    return jnp.sum(jnp.where(pos, ct * jnp.log2(safe_ct / safe_den), 0.0))


if __name__ == "__main__":
    key = jax.random.PRNGKey(0)
    keys = jax.random.split(key, 8)

    def make_table(kv, km, r, c, thresh):
        counts = jax.random.uniform(kv, (r, c), dtype=jnp.float32)
        mask = (jax.random.uniform(km, (r, c)) > thresh).astype(jnp.float32)
        t = counts * mask
        return t / jnp.sum(t)

    # 1) small table -> single-block fast path
    t1 = make_table(keys[0], keys[1], 8, 16, 0.3)
    r1 = jax.block_until_ready(mutual_information(t1))
    assert r1.shape == () and r1.dtype == jnp.float32
    assert jnp.allclose(r1, _mi_reference(t1), rtol=5e-4, atol=5e-4), (r1, _mi_reference(t1))

    # 2) ragged tiled path (forced small tiles): exercises edge-tile masking
    t2 = make_table(keys[2], keys[3], 200, 300, 0.4)
    r2 = jax.block_until_ready(mutual_information(
        t2, single_block_max_elems=0, tile_rows=64, tile_cols=128))
    assert jnp.allclose(r2, _mi_reference(t2), rtol=5e-4, atol=5e-4), (r2, _mi_reference(t2))

    # 3) evenly divisible tiled path (no masking traced in)
    t3 = make_table(keys[4], keys[5], 256, 384, 0.5)
    r3 = jax.block_until_ready(mutual_information(
        t3, single_block_max_elems=0, tile_rows=128, tile_cols=128))
    assert jnp.allclose(r3, _mi_reference(t3), rtol=5e-4, atol=5e-4), (r3, _mi_reference(t3))

    # 4) tall-skinny table: narrow (<128) last dim kept as the full block dim,
    #    no transpose pass.
    t4 = make_table(keys[6], keys[7], 300, 40, 0.4)
    r4 = jax.block_until_ready(mutual_information(
        t4, single_block_max_elems=0, tile_rows=64, tile_cols=128))
    assert jnp.allclose(r4, _mi_reference(t4), rtol=5e-4, atol=5e-4), (r4, _mi_reference(t4))

    print("KERNEL_OK")
</pallas_src>

<mosaic_0001>
module attributes {stable_mosaic.version = 11 : i64} {
  func.func @_mi_single_block_kernel(%arg0: memref<8x16xf32, #tpu.memory_space<vmem>>, %arg1: memref<1x1xf32, #tpu.memory_space<smem>>) attributes {dimension_semantics = [], scalar_prefetch = 0 : i64, scratch_operands = 0 : i64, tpu.core_type = #tpu.core_type<tc>} {
    %c0 = arith.constant 0 : index
    %c0_0 = arith.constant 0 : index
    %0 = vector.load %arg0[%c0, %c0_0] : memref<8x16xf32, #tpu.memory_space<vmem>>, vector<8x16xf32>
    %cst = arith.constant 0.000000e+00 : f32
    %1 = vector.broadcast %cst : f32 to vector<8x16xf32>
    %2 = arith.cmpf ogt, %0, %1 : vector<8x16xf32>
    %cst_1 = arith.constant 1.000000e+00 : f32
    %3 = vector.broadcast %cst_1 : f32 to vector<8x16xf32>
    %4 = arith.select %2, %0, %3 : vector<8x16xi1>, vector<8x16xf32>
    %5 = math.log %4 : vector<8x16xf32>
    %cst_2 = arith.constant 1.44269502 : f32
    %6 = vector.broadcast %cst_2 : f32 to vector<8x16xf32>
    %7 = arith.mulf %5, %6 : vector<8x16xf32>
    %8 = arith.mulf %0, %7 : vector<8x16xf32>
    %9 = vector.shape_cast %8 : vector<8x16xf32> to vector<1x8x16xf32>
    %cst_3 = arith.constant dense<0.000000e+00> : vector<1xf32>
    %10 = vector.multi_reduction <add>, %9, %cst_3 [1, 2] : vector<1x8x16xf32> to vector<1xf32>
    %11 = vector.shape_cast %10 : vector<1xf32> to vector<1x1x1xf32>
    %12 = vector.extract %11[0, 0, 0] : f32 from vector<1x1x1xf32>
    %cst_4 = arith.constant dense<0.000000e+00> : vector<8xf32>
    %13 = vector.multi_reduction <add>, %0, %cst_4 [1] : vector<8x16xf32> to vector<8xf32>
    %14 = vector.shape_cast %13 : vector<8xf32> to vector<8x1xf32>
    %cst_5 = arith.constant dense<0.000000e+00> : vector<16xf32>
    %15 = vector.multi_reduction <add>, %0, %cst_5 [0] : vector<8x16xf32> to vector<16xf32>
    %16 = vector.shape_cast %15 : vector<16xf32> to vector<1x16xf32>
    %cst_6 = arith.constant 0.000000e+00 : f32
    %17 = vector.broadcast %cst_6 : f32 to vector<8x1xf32>
    %18 = arith.cmpf ogt, %14, %17 : vector<8x1xf32>
    %cst_7 = arith.constant 1.000000e+00 : f32
    %19 = vector.broadcast %cst_7 : f32 to vector<8x1xf32>
    %20 = arith.select %18, %14, %19 : vector<8x1xi1>, vector<8x1xf32>
    %21 = math.log %20 : vector<8x1xf32>
    %cst_8 = arith.constant 1.44269502 : f32
    %22 = vector.broadcast %cst_8 : f32 to vector<8x1xf32>
    %23 = arith.mulf %21, %22 : vector<8x1xf32>
    %24 = arith.mulf %14, %23 : vector<8x1xf32>
    %25 = vector.shape_cast %24 : vector<8x1xf32> to vector<1x8x1xf32>
    %cst_9 = arith.constant dense<0.000000e+00> : vector<1xf32>
    %26 = vector.multi_reduction <add>, %25, %cst_9 [1, 2] : vector<1x8x1xf32> to vector<1xf32>
    %27 = vector.shape_cast %26 : vector<1xf32> to vector<1x1x1xf32>
    %28 = vector.extract %27[0, 0, 0] : f32 from vector<1x1x1xf32>
    %cst_10 = arith.constant 0.000000e+00 : f32
    %29 = vector.broadcast %cst_10 : f32 to vector<1x16xf32>
    %30 = arith.cmpf ogt, %16, %29 : vector<1x16xf32>
    %cst_11 = arith.constant 1.000000e+00 : f32
    %31 = vector.broadcast %cst_11 : f32 to vector<1x16xf32>
    %32 = arith.select %30, %16, %31 : vector<1x16xi1>, vector<1x16xf32>
    %33 = math.log %32 : vector<1x16xf32>
    %cst_12 = arith.constant 1.44269502 : f32
    %34 = vector.broadcast %cst_12 : f32 to vector<1x16xf32>
    %35 = arith.mulf %33, %34 : vector<1x16xf32>
    %36 = arith.mulf %16, %35 : vector<1x16xf32>
    %37 = vector.shape_cast %36 : vector<1x16xf32> to vector<1x1x16xf32>
    %cst_13 = arith.constant dense<0.000000e+00> : vector<1xf32>
    %38 = vector.multi_reduction <add>, %37, %cst_13 [1, 2] : vector<1x1x16xf32> to vector<1xf32>
    %39 = vector.shape_cast %38 : vector<1xf32> to vector<1x1x1xf32>
    %40 = vector.extract %39[0, 0, 0] : f32 from vector<1x1x1xf32>
    %41 = arith.subf %12, %28 : f32
    %42 = arith.subf %41, %40 : f32
    %c0_14 = arith.constant 0 : index
    %c0_15 = arith.constant 0 : index
    %43 = memref.load %arg1[%c0_14, %c0_15] : memref<1x1xf32, #tpu.memory_space<smem>>
    memref.store %42, %arg1[%c0_14, %c0_15] : memref<1x1xf32, #tpu.memory_space<smem>>
    return
  }
}

</mosaic_0001>

<llo_original>
// kernel: tpu_custom_call.1
$region0: #{tpu_custom_call.1}
  #allocation0 [shape = 'u32[]', space=smem, size = 0x4, offset = 0x4, fixed_abs, tag = 'smem constant byte address 0x4 - core index']
  #allocation1 [shape = 'u32[144,128]{1,0:T(1,128)}', space=vmem, size = 0x12000, scoped, tag = 'internal scratch']
  %s0 = inlined_call_operand.hbm [shape: f32[8,16], index: 0, kind: input, shape index: {}]
  %s1 = inlined_call_operand.hbm [shape: f32[1,1], index: 1, kind: output, shape index: {}]
  %s2 = sld [smem:[#allocation0]]
  $region18: #{tpu_custom_call.1} parent=0
    _
  %s4 = ssub.s32 1, %s2
  %s5 = scalar_select 0, %s4, %s2
  $region1: #{tpu_custom_call.1} parent=0
    #allocation2 [shape = 'u8[4096]{0}', space=vmem, size = 0x1000, scoped, tag = 'input window, operand 0, single buffered']
    #allocation3 [shape = 's32[1]{0}', space=sflag, size = 0x4, scoped, tag = 'scoped memory for tpu_custom_call.1']
    #allocation4 [shape = 's32[1]{0}', space=sflag, size = 0x4, scoped, tag = 'scoped memory for tpu_custom_call.1']
    #allocation5 [shape = 'u8[512]{0}', space=smem, size = 0x200, scoped, tag = 'output window, operand 0, single buffered']
    %6 = vsyncpa [#allocation3], 0
    %7 = vsyncpa [#allocation4], 0
    // Predicated region
    $region2: #{tpu_custom_call.1} parent=1 // pred_check
      _
    $region3: #{tpu_custom_call.1} parent=1 // pred_check_branch
      %9 = sbr.rel (0) target = $region5
    $region4: #{tpu_custom_call.1} parent=1 // pred_region
      %s11 = ssub.s32 128, 128
      %12 = vsyncadd [#allocation3], %s11
      %s14 = sshll.u32 [#allocation2], 4
      %s15 = int_to_ptr.vmem [resolvable:$true] %s14
      %17 = dma.hbm_to_vmem [thread:$0]  %s0, 128, %s15, [#allocation3]
    $region5: #{tpu_custom_call.1} parent=1 // pred_fallthru
      _
    // Predicated region
    $region6: #{tpu_custom_call.1} parent=1 // pred_check
      _
    $region7: #{tpu_custom_call.1} parent=1 // pred_check_branch
      %19 = sbr.rel (0) target = $region9
    $region8: #{tpu_custom_call.1} parent=1 // pred_region
      %20 = dma.done [#allocation3], 128
    $region9: #{tpu_custom_call.1} parent=1 // pred_fallthru
      _
    %v21 = vld [vmem:[#allocation2] sm:$0xff]
    %vm22 = vcmp.gt.f32.partialorder %v21, 0.0
    %v23 = vsel %vm22, %v21, 1.0
    %v24 = vlog2.pop %v23
    %v25 = vmul.f32 %v24, 0.6931472
    %v26 = vmul.f32 %v25, 1.442695
    %v27 = vmul.f32 %v21, %v26
    %vm28 = vcmask 130048
    %v29 = vsel %vm28, %v27, 0.0
    %30 = vadd.xlane.f32.xlu0 %v29
    %v31 = vpop.xlane.xlu0 %30
    %v32 = vrot.slane %v31, 4
    %v33 = vadd.f32 %v31, %v32
    %v34 = vrot.slane %v33, 2
    %v35 = vadd.f32 %v33, %v34
    %v36 = vrot.slane %v35, 1
    %v37 = vadd.f32 %v35, %v36
    %s38 = vtos %v37
    %v39 = vsel %vm28, %v21, 0.0
    %40 = vadd.xlane.f32.xlu0 %v39
    %v41 = vpop.xlane.xlu0 %40
    %v42 = vrot.slane %v39, 4
    %v43 = vadd.f32 %v39, %v42
    %v44 = vrot.slane %v43, 2
    %v45 = vadd.f32 %v43, %v44
    %v46 = vrot.slane %v45, 1
    %v47 = vadd.f32 %v45, %v46
    %vm48 = vcmp.gt.f32.partialorder %v41, 0.0
    %v49 = vsel %vm48, %v41, 1.0
    %v50 = vlog2.pop %v49
    %v51 = vmul.f32 %v50, 0.6931472
    %v52 = vmul.f32 %v51, 1.442695
    %v53 = vmul.f32 %v41, %v52
    %vm54 = vcmask 7168
    %v55 = vsel %vm54, %v53, 0.0
    %56 = vadd.xlane.f32.xlu0 %v55
    %v57 = vpop.xlane.xlu0 %56
    %v58 = vrot.slane %v57, 4
    %v59 = vadd.f32 %v57, %v58
    %v60 = vrot.slane %v59, 2
    %v61 = vadd.f32 %v59, %v60
    %v62 = vrot.slane %v61, 1
    %v63 = vadd.f32 %v61, %v62
    %s64 = vtos %v63
    %vm65 = vcmp.gt.f32.partialorder %v47, 0.0
    %v66 = vsel %vm65, %v47, 1.0
    %v67 = vlog2.pop %v66
    %v68 = vmul.f32 %v67, 0.6931472
    %v69 = vmul.f32 %v68, 1.442695
    %v70 = vmul.f32 %v47, %v69
    %vm71 = vcmask 122880
    %v72 = vsel %vm71, %v70, 0.0
    %73 = vadd.xlane.f32.xlu0 %v72
    %v74 = vpop.xlane.xlu0 %73
    %v75 = vrot.slane %v74, 4
    %v76 = vadd.f32 %v74, %v75
    %v77 = vrot.slane %v76, 2
    %v78 = vadd.f32 %v76, %v77
    %v79 = vrot.slane %v78, 1
    %v80 = vadd.f32 %v78, %v79
    %s81 = vtos %v80
    %s82 = ssub.f32 %s38, %s64
    %s83 = ssub.f32 %s82, %s81
    %s84 = scalar_lea.smem [#allocation5], 0
    %85 = sst [smem:[%s84]] %s83
    // Predicated region
    $region10: #{tpu_custom_call.1} parent=1 // pred_check
      _
    $region11: #{tpu_custom_call.1} parent=1 // pred_check_branch
      %87 = sbr.rel (0) target = $region13
    $region12: #{tpu_custom_call.1} parent=1 // pred_region
      %s89 = ssub.s32 16, 16
      %90 = vsyncadd [#allocation4], %s89
      %93 = dma.smem_to_hbm [#allocation5], 16, %s1, [#allocation4]
    $region13: #{tpu_custom_call.1} parent=1 // pred_fallthru
      _
    // Predicated region
    $region14: #{tpu_custom_call.1} parent=1 // pred_check
      _
    $region15: #{tpu_custom_call.1} parent=1 // pred_check_branch
      %95 = sbr.rel (0) target = $region17
    $region16: #{tpu_custom_call.1} parent=1 // pred_region
      %96 = dma.done [#allocation4], 16
    $region17: #{tpu_custom_call.1} parent=1 // pred_fallthru
      _
    %97 = sfence
    %98 = vsyncpa [#allocation3], 1
    %99 = vsyncpa [#allocation4], 1

</llo_original>
